<compile_context>
chip_gen: v7x
topology: tpu7x:2x2x1
jax: 0.10.0
libtpu: 0.0.40
codegen_flags: <defaults>
</compile_context>

<pallas_src>
import numpy as np
import jax
import jax.numpy as jnp
from jax import lax
from jax.experimental import pallas as pl
from jax.experimental.pallas import tpu as pltpu

LANES = 128
SUBLANES = 8
MAX_BLOCK_ROWS = 8192     # 8192 x 128 x 4B = 4 MiB per f32 input block
CHUNK_ROWS = 256          # 256 x 128 f32 = 32 vregs per intermediate


def _round_up(n: int, m: int) -> int:
    return ((n + m - 1) // m) * m


def _make_kernel(block_rows: int, inner_blocks: int, rows_valid: int,
                 needs_mask: bool):
    n_full = block_rows // CHUNK_ROWS
    tail_rows = block_rows % CHUNK_ROWS          # multiple of 8 (or 0)

    def kernel(x_ref, y_ref, out_ref):
        i = pl.program_id(1)

        @pl.when(i == 0)
        def _init():
            out_ref[...] = jnp.zeros_like(out_ref)

        if needs_mask:
            logical_block = pl.program_id(0) * inner_blocks + i
            valid_rows = jnp.clip(rows_valid - logical_block * block_rows,
                                  0, block_rows)
        else:
            valid_rows = None

        def chunk_partial(r0, nrows):
            x = x_ref[pl.ds(r0, nrows), :].astype(jnp.float32)
            y = y_ref[pl.ds(r0, nrows), :].astype(jnp.float32)
            d = jnp.tanh(x) - y
            d2 = d * d
            if needs_mask:
                row_ids = lax.broadcasted_iota(jnp.int32, (nrows, LANES), 0)
                d2 = jnp.where(row_ids < (valid_rows - r0), d2,
                               jnp.float32(0.0))
            # Sublane-group accumulate with plain VPU adds -> (8, 128).
            return d2.reshape(-1, SUBLANES, LANES).sum(axis=0)

        acc = jnp.zeros((SUBLANES, LANES), jnp.float32)
        if n_full > 0:
            def body(k, a):
                r0 = pl.multiple_of(k * CHUNK_ROWS, CHUNK_ROWS)
                return a + chunk_partial(r0, CHUNK_ROWS)
            unroll = True if n_full <= 8 else 4
            acc = lax.fori_loop(0, n_full, body, acc, unroll=unroll)
        if tail_rows:
            acc = acc + chunk_partial(n_full * CHUNK_ROWS, tail_rows)

        out_ref[...] += acc[None, :, :]

    return kernel


def hover_loss(hv_logits: jax.Array, hv_targets: jax.Array) -> jax.Array:
    """10 * mean((tanh(hv_logits) - hv_targets)^2), computed in Pallas."""
    assert hv_logits.shape == hv_targets.shape
    n_elems = int(np.prod(hv_logits.shape))

    # Keep native dtype (cast to f32 inside the kernel).
    x = hv_logits.reshape(-1)
    y = hv_targets.reshape(-1)

    # Minimal pad so the data forms whole (8, 128) tiles. Rare in practice;
    # zero padding is exact (tanh(0) - 0 == 0), divisor stays n_elems.
    padded = _round_up(n_elems, SUBLANES * LANES)
    if padded != n_elems:
        x = jnp.pad(x, (0, padded - n_elems))
        y = jnp.pad(y, (0, padded - n_elems))

    rows = padded // LANES                         # multiple of 8
    block_rows = min(rows, MAX_BLOCK_ROWS)         # multiple of 8
    n_blocks = -(-rows // block_rows)
    n_split = 2 if n_blocks >= 2 else 1            # v7x megacore split
    inner_blocks = -(-n_blocks // n_split)

    # Mask only when a grid step can see rows past the valid extent
    # (ragged boundary block, or a duplicated block from an uneven split).
    needs_mask = (rows % block_rows != 0) or (n_blocks % n_split != 0)

    x2 = x.reshape(rows, LANES)
    y2 = y.reshape(rows, LANES)

    if needs_mask:
        def in_map(c, i):
            # Clamp duplicated trailing blocks to a valid DMA source; their
            # contribution is masked to zero inside the kernel.
            return (jnp.minimum(c * inner_blocks + i, n_blocks - 1), 0)
    else:
        def in_map(c, i):
            return (c * inner_blocks + i, 0)

    itemsize = int(jnp.dtype(x2.dtype).itemsize)
    # 2 inputs x 2 pipeline buffers per block, plus 16 MiB headroom for the
    # f32 chunk intermediates / output / compiler scratch. <= 32 MiB, safe on
    # v5e/v6e (128 MiB) and v7x (64 MiB per TC).
    vmem_limit = int(2 * 2 * block_rows * LANES * itemsize + (16 << 20))

    kernel = _make_kernel(block_rows, inner_blocks, rows, needs_mask)

    partials = pl.pallas_call(
        kernel,
        out_shape=jax.ShapeDtypeStruct((n_split, SUBLANES, LANES),
                                       jnp.float32),
        grid_spec=pltpu.PrefetchScalarGridSpec(
            num_scalar_prefetch=0,
            grid=(n_split, inner_blocks),
            in_specs=[
                pl.BlockSpec((block_rows, LANES), in_map),
                pl.BlockSpec((block_rows, LANES), in_map),
            ],
            out_specs=pl.BlockSpec((1, SUBLANES, LANES),
                                   lambda c, i: (c, 0, 0)),
        ),
        compiler_params=pltpu.CompilerParams(
            dimension_semantics=("parallel", "arbitrary"),
            vmem_limit_bytes=vmem_limit,
        ),
        cost_estimate=pl.CostEstimate(
            flops=3 * n_elems,
            transcendentals=n_elems,
            bytes_accessed=2 * n_elems * itemsize
            + n_split * SUBLANES * LANES * 4,
        ),
    )(x2, y2)

    # Tiny second-level reduce (2048 f32 at most) + final scaling.
    la = jnp.sum(partials, dtype=jnp.float32) / jnp.float32(n_elems)
    return jnp.float32(10.0) * la


def _hover_loss_ref(hv_logits, hv_targets):
    d = jnp.tanh(hv_logits.astype(jnp.float32)) - hv_targets.astype(jnp.float32)
    return 10.0 * jnp.mean(d * d)


if __name__ == "__main__":
    # HoVer-Net HV branch: 2 channels (horizontal / vertical maps), NCHW.
    B, C, H, W = 2, 2, 16, 16
    key = jax.random.PRNGKey(0)
    k1, k2 = jax.random.split(key)
    hv_logits = jax.random.normal(k1, (B, C, H, W), dtype=jnp.float32)
    hv_targets = jax.random.uniform(k2, (B, C, H, W), dtype=jnp.float32,
                                    minval=-1.0, maxval=1.0)

    loss = jax.block_until_ready(hover_loss(hv_logits, hv_targets))
    ref = jax.block_until_ready(_hover_loss_ref(hv_logits, hv_targets))

    np.testing.assert_allclose(np.asarray(loss), np.asarray(ref),
                               rtol=1e-5, atol=1e-5)
    print("KERNEL_OK")
</pallas_src>

<mosaic_0001>
module attributes {stable_mosaic.version = 11 : i64} {
  func.func @kernel(%arg0: i32, %arg1: i32, %arg2: memref<8x128xf32, #tpu.memory_space<vmem>>, %arg3: memref<8x128xf32, #tpu.memory_space<vmem>>, %arg4: memref<1x8x128xf32, #tpu.memory_space<vmem>>) attributes {dimension_semantics = [#tpu.dimension_semantics<parallel>, #tpu.dimension_semantics<arbitrary>], iteration_bounds = array<i64: 1, 1>, scalar_prefetch = 0 : i64, scratch_operands = 0 : i64, tpu.core_type = #tpu.core_type<tc>, window_params = [{transform_indices = @transform_0, window_bounds = array<i64: 8, 128>}, {transform_indices = @transform_1, window_bounds = array<i64: 8, 128>}, {transform_indices = @transform_2, window_bounds = array<i64: 1, 8, 128>}]} {
    %c0_i32 = arith.constant 0 : i32
    %0 = arith.cmpi eq, %arg1, %c0_i32 : i32
    %1 = arith.extui %0 : i1 to i32
    %c0_i32_0 = arith.constant 0 : i32
    %2 = arith.cmpi ne, %1, %c0_i32_0 : i32
    scf.if %2 {
      %cst_11 = arith.constant 0.000000e+00 : f32
      %16 = vector.broadcast %cst_11 : f32 to vector<1x8x128xf32>
      %c0_12 = arith.constant 0 : index
      %c0_13 = arith.constant 0 : index
      %c0_14 = arith.constant 0 : index
      %17 = vector.load %arg4[%c0_12, %c0_13, %c0_14] : memref<1x8x128xf32, #tpu.memory_space<vmem>>, vector<1x8x128xf32>
      tpu.vector_store %arg4[%c0_12, %c0_13, %c0_14], %16 {strides = array<i32>} : memref<1x8x128xf32, #tpu.memory_space<vmem>>, vector<1x8x128xf32>,
    } else {
    }
    %cst = arith.constant 0.000000e+00 : f32
    %3 = vector.broadcast %cst : f32 to vector<8x128xf32>
    %c0 = arith.constant 0 : index
    %c0_1 = arith.constant 0 : index
    %4 = vector.load %arg2[%c0, %c0_1] : memref<8x128xf32, #tpu.memory_space<vmem>>, vector<8x128xf32>
    %c0_2 = arith.constant 0 : index
    %c0_3 = arith.constant 0 : index
    %5 = vector.load %arg3[%c0_2, %c0_3] : memref<8x128xf32, #tpu.memory_space<vmem>>, vector<8x128xf32>
    %6 = math.tanh %4 : vector<8x128xf32>
    %7 = arith.subf %6, %5 : vector<8x128xf32>
    %8 = arith.mulf %7, %7 : vector<8x128xf32>
    %9 = vector.shape_cast %8 : vector<8x128xf32> to vector<1x8x128xf32>
    %cst_4 = arith.constant dense<0.000000e+00> : vector<8x128xf32>
    %10 = vector.multi_reduction <add>, %9, %cst_4 [0] : vector<1x8x128xf32> to vector<8x128xf32>
    %11 = arith.addf %3, %10 : vector<8x128xf32>
    %c0_5 = arith.constant 0 : index
    %c0_6 = arith.constant 0 : index
    %c0_7 = arith.constant 0 : index
    %12 = vector.load %arg4[%c0_5, %c0_6, %c0_7] : memref<1x8x128xf32, #tpu.memory_space<vmem>>, vector<1x8x128xf32>
    %13 = vector.shape_cast %11 : vector<8x128xf32> to vector<1x8x128xf32>
    %14 = arith.addf %12, %13 : vector<1x8x128xf32>
    %c0_8 = arith.constant 0 : index
    %c0_9 = arith.constant 0 : index
    %c0_10 = arith.constant 0 : index
    %15 = vector.load %arg4[%c0_8, %c0_9, %c0_10] : memref<1x8x128xf32, #tpu.memory_space<vmem>>, vector<1x8x128xf32>
    tpu.vector_store %arg4[%c0_8, %c0_9, %c0_10], %14 {strides = array<i32>} : memref<1x8x128xf32, #tpu.memory_space<vmem>>, vector<1x8x128xf32>,
    return
  }
  func.func @transform_0(%arg0: i32, %arg1: i32) -> (i32, i32) {
    %c1_i32 = arith.constant 1 : i32
    %0 = arith.muli %arg0, %c1_i32 : i32
    %1 = arith.addi %0, %arg1 : i32
    %c0_i32 = arith.constant 0 : i32
    %c0_i32_0 = arith.constant 0 : i32
    return %1, %c0_i32 : i32, i32
  }
  func.func @transform_1(%arg0: i32, %arg1: i32) -> (i32, i32) {
    %c1_i32 = arith.constant 1 : i32
    %0 = arith.muli %arg0, %c1_i32 : i32
    %1 = arith.addi %0, %arg1 : i32
    %c0_i32 = arith.constant 0 : i32
    %c0_i32_0 = arith.constant 0 : i32
    return %1, %c0_i32 : i32, i32
  }
  func.func @transform_2(%arg0: i32, %arg1: i32) -> (i32, i32, i32) {
    %c0_i32 = arith.constant 0 : i32
    %c0_i32_0 = arith.constant 0 : i32
    %c0_i32_1 = arith.constant 0 : i32
    return %arg0, %c0_i32, %c0_i32_0 : i32, i32, i32
  }
}

</mosaic_0001>

<llo_original>
// kernel: tpu_custom_call.1
$region0: #{tpu_custom_call.1}
  #allocation0 [shape = 'u32[]', space=smem, size = 0x4, offset = 0x4, fixed_abs, tag = 'smem constant byte address 0x4 - core index']
  #allocation1 [shape = 'u32[144,128]{1,0:T(1,128)}', space=vmem, size = 0x12000, scoped, tag = 'internal scratch']
  %s0 = inlined_call_operand.hbm [shape: f32[8,128], index: 0, kind: input, shape index: {}]
  %s1 = inlined_call_operand.hbm [shape: f32[8,128], index: 1, kind: input, shape index: {}]
  %s2 = inlined_call_operand.hbm [shape: f32[1,8,128], index: 2, kind: output, shape index: {}]
  %s3 = sld [smem:[#allocation0]]
  $region30: #{tpu_custom_call.1} parent=0
    _
  %s5 = ssub.s32 1, %s3
  %s6 = scalar_select 0, %s5, %s3
  $region1: #{tpu_custom_call.1} parent=0
    #allocation2 [shape = 'u8[4096]{0}', space=vmem, size = 0x1000, scoped, tag = 'input window, operand 0, single buffered']
    #allocation3 [shape = 's32[1]{0}', space=sflag, size = 0x4, scoped, tag = 'scoped memory for tpu_custom_call.1']
    #allocation4 [shape = 's32[1]{0}', space=sflag, size = 0x4, scoped, tag = 'scoped memory for tpu_custom_call.1']
    #allocation5 [shape = 'u8[4096]{0}', space=vmem, size = 0x1000, scoped, tag = 'input window, operand 1, single buffered']
    #allocation6 [shape = 's32[1]{0}', space=sflag, size = 0x4, scoped, tag = 'scoped memory for tpu_custom_call.1']
    #allocation7 [shape = 'u8[4096]{0}', space=vmem, size = 0x1000, scoped, tag = 'output window, operand 0, single buffered']
    %7 = vsyncpa [#allocation3], 0
    %8 = vsyncpa [#allocation6], 0
    %9 = vsyncpa [#allocation4], 0
    // Predicated region
    $region2: #{tpu_custom_call.1} parent=1 // pred_check
      _
    $region3: #{tpu_custom_call.1} parent=1 // pred_check_branch
      %11 = sbr.rel (0) target = $region5
    $region4: #{tpu_custom_call.1} parent=1 // pred_region
      %s12 = sadd.s32 0, 0
      %s14 = ssub.s32 128, 128
      %15 = vsyncadd [#allocation3], %s14
      %s16 = smul.addr %s12, 128
      %s17 = scalar_lea.hbm %s0, %s16
      %s19 = sshll.u32 [#allocation2], 4
      %s20 = int_to_ptr.vmem [resolvable:$true] %s19
      %22 = dma.hbm_to_vmem [thread:$0]  %s17, 128, %s20, [#allocation3]
    $region5: #{tpu_custom_call.1} parent=1 // pred_fallthru
      _
    // Predicated region
    $region6: #{tpu_custom_call.1} parent=1 // pred_check
      _
    $region7: #{tpu_custom_call.1} parent=1 // pred_check_branch
      %24 = sbr.rel (0) target = $region9
    $region8: #{tpu_custom_call.1} parent=1 // pred_region
      %s25 = sadd.s32 0, 0
      %s27 = ssub.s32 128, 128
      %28 = vsyncadd [#allocation6], %s27
      %s29 = smul.addr %s25, 128
      %s30 = scalar_lea.hbm %s1, %s29
      %s32 = sshll.u32 [#allocation5], 4
      %s33 = int_to_ptr.vmem [resolvable:$true] %s32
      %35 = dma.hbm_to_vmem [thread:$0]  %s30, 128, %s33, [#allocation6]
    $region9: #{tpu_custom_call.1} parent=1 // pred_fallthru
      _
    // Predicated region
    $region10: #{tpu_custom_call.1} parent=1 // pred_check
      _
    $region11: #{tpu_custom_call.1} parent=1 // pred_check_branch
      %37 = sbr.rel (0) target = $region13
    $region12: #{tpu_custom_call.1} parent=1 // pred_region
      %38 = dma.done [#allocation3], 128
    $region13: #{tpu_custom_call.1} parent=1 // pred_fallthru
      _
    // Predicated region
    $region14: #{tpu_custom_call.1} parent=1 // pred_check
      _
    $region15: #{tpu_custom_call.1} parent=1 // pred_check_branch
      %40 = sbr.rel (0) target = $region17
    $region16: #{tpu_custom_call.1} parent=1 // pred_region
      %41 = dma.done [#allocation6], 128
    $region17: #{tpu_custom_call.1} parent=1 // pred_fallthru
      _
    %s42 = sadd.s32 0, 0
    %s43 = sadd.s32 0, 0
    %p44 = scmp.eq.s32.totalorder 0, 0
    // Predicated region
    $region18: #{tpu_custom_call.1} parent=1 // pred_check
      %p45 = pneg %p44
    $region19: #{tpu_custom_call.1} parent=1 // pred_check_branch
      %47 = sbr.rel (%p45) target = $region21
    $region20: #{tpu_custom_call.1} parent=1 // pred_region
      %48 = vst [vmem:[#allocation7] sm:$0xff] 0.0
    $region21: #{tpu_custom_call.1} parent=1 // pred_fallthru
      _
    %v49 = vld [vmem:[#allocation2] sm:$0xff]
    %v50 = vld [vmem:[#allocation5] sm:$0xff]
    %v51 = vtanh.pop %v49
    %v52 = vsub.f32 %v51, %v50
    %v53 = vmul.f32 %v52, %v52
    %v54 = vadd.f32 %v53, 0.0
    %v55 = vadd.f32 %v54, 0.0
    %v56 = vld [vmem:[#allocation7] sm:$0xff]
    %v57 = vadd.f32 %v56, %v55
    %58 = vst [vmem:[#allocation7] sm:$0xff] %v57
    // Predicated region
    $region22: #{tpu_custom_call.1} parent=1 // pred_check
      _
    $region23: #{tpu_custom_call.1} parent=1 // pred_check_branch
      %60 = sbr.rel (0) target = $region25
    $region24: #{tpu_custom_call.1} parent=1 // pred_region
      %s62 = ssub.s32 128, 128
      %63 = vsyncadd [#allocation4], %s62
      %s65 = sshll.u32 [#allocation7], 4
      %s66 = int_to_ptr.vmem [resolvable:$true] %s65
      %68 = dma.vmem_to_hbm [thread:$0]  %s66, 128, %s2, [#allocation4]
    $region25: #{tpu_custom_call.1} parent=1 // pred_fallthru
      _
    // Predicated region
    $region26: #{tpu_custom_call.1} parent=1 // pred_check
      _
    $region27: #{tpu_custom_call.1} parent=1 // pred_check_branch
      %70 = sbr.rel (0) target = $region29
    $region28: #{tpu_custom_call.1} parent=1 // pred_region
      %71 = dma.done [#allocation4], 128
    $region29: #{tpu_custom_call.1} parent=1 // pred_fallthru
      _
    %72 = vsyncpa [#allocation3], 1
    %73 = vsyncpa [#allocation6], 1
    %74 = vsyncpa [#allocation4], 1

</llo_original>
